<compile_context>
chip_gen: v7x
topology: tpu7x:2x2x1
jax: 0.10.0
libtpu: 0.0.40
codegen_flags: <defaults>
</compile_context>

<pallas_src>
import functools

import jax
import jax.numpy as jnp
from jax.experimental import pallas as pl
from jax.experimental.pallas import tpu as pltpu


def _round_up(x, m):
    return (x + m - 1) // m * m


def _dice_kernel(x_ref, t_ref, dice_ref, inter_ref, total_ref, *,
                 smooth, hw, hw_tile, mask_lanes):
    # Grid = (row blocks [parallel], HW blocks [arbitrary / reduction]).
    # x_ref / t_ref: (TB, HW_TILE); dice_ref: (1, TB) lane-dense output;
    # inter_ref / total_ref: (1, TB) f32 VMEM accumulators.
    k = pl.program_id(1)

    @pl.when(k == 0)
    def _():
        inter_ref[...] = jnp.zeros_like(inter_ref)
        total_ref[...] = jnp.zeros_like(total_ref)

    x = x_ref[...].astype(jnp.float32)
    t = t_ref[...].astype(jnp.float32)

    if mask_lanes:
        # Only needed when hw % hw_tile != 0: zero out-of-range lanes of the
        # partial last HW tile (cheap VPU work, hidden under the DMA).
        col = jax.lax.broadcasted_iota(jnp.int32, x.shape, 1) + k * hw_tile
        valid = col < hw
        x = jnp.where(valid, x, 0.0)
        t = jnp.where(valid, t, 0.0)

    inter = jnp.sum(x * t, axis=-1)          # (TB,)
    total = jnp.sum(x + t, axis=-1)          # (TB,) == x.sum + t.sum, one pass

    inter_ref[...] += inter[None, :]
    total_ref[...] += total[None, :]

    @pl.when(k == pl.num_programs(1) - 1)
    def _():
        dice_ref[...] = (2.0 * inter_ref[...] + smooth) / (total_ref[...] + smooth)


def dice_loss(inputs, targets, smooth=1.0):
    """Returns (loss.mean(), dice.mean()) exactly like the PyTorch module."""
    N, C, H, W = inputs.shape
    nc = N * C
    hw = H * W

    x = inputs.reshape(nc, hw)
    t = targets.reshape(nc, hw)

    itemsize = max(x.dtype.itemsize, t.dtype.itemsize)
    sub = max(8, 32 // itemsize)            # sublane tile: f32->8, bf16->16, int8->32

    # Generation-aware VMEM budget (v5e/v6e: 128 MiB physical, v7x: 64 MiB).
    try:
        vmem_cap = int(pltpu.get_tpu_info().vmem_capacity_bytes)
    except Exception:
        vmem_cap = 64 * 1024 * 1024
    vmem_limit = min(64 * 1024 * 1024, (3 * vmem_cap) // 4)
    vmem_limit = max(vmem_limit, 16 * 1024 * 1024)
    tile_budget = vmem_limit // 2           # 2 inputs x 2 pipeline buffers
    max_tile_elems = tile_budget // (4 * itemsize)   # bound on tb * hw_tile

    # Row-block target: cover nc, but keep >= 2 row blocks when nc permits so
    # the "parallel" axis can be sharded across both TensorCores on v7x.
    tb_nc = _round_up(nc, sub)
    if nc >= 2 * sub:
        tb_nc = min(tb_nc, _round_up(pl.cdiv(nc, 2), sub))

    if hw * sub <= max_tile_elems:
        # Full-width rows fit in VMEM: last block dim == full hw (exempt from
        # the 128-divisibility rule), single HW block, no masking.
        hw_tile = hw
        tb = min(tb_nc, max_tile_elems // hw)
    else:
        # Large planes: reduce over 128-aligned, VMEM-sized HW tiles.
        tb = min(tb_nc, 512)
        hw_tile = (max_tile_elems // tb) // 128 * 128
        hw_tile = max(128, min(hw_tile, _round_up(hw, 128)))

    if tb >= 128:
        tb = (tb // 128) * 128              # unmasked lane-dense (1, tb) stores
    else:
        tb = max(sub, (tb // sub) * sub)

    n_row = pl.cdiv(nc, tb)                 # partial last row block allowed
    n_hw = pl.cdiv(hw, hw_tile)             # partial last HW block -> masked
    mask_lanes = (hw % hw_tile) != 0

    kernel = functools.partial(
        _dice_kernel, smooth=float(smooth), hw=hw, hw_tile=hw_tile,
        mask_lanes=mask_lanes)

    dice_blocks = pl.pallas_call(
        kernel,
        out_shape=jax.ShapeDtypeStruct((n_row, tb), jnp.float32),
        grid=(n_row, n_hw),
        in_specs=[
            pl.BlockSpec((tb, hw_tile), lambda i, k: (i, k)),
            pl.BlockSpec((tb, hw_tile), lambda i, k: (i, k)),
        ],
        out_specs=pl.BlockSpec((1, tb), lambda i, k: (i, 0)),
        scratch_shapes=[
            pltpu.VMEM((1, tb), jnp.float32),   # per-row intersection accum
            pltpu.VMEM((1, tb), jnp.float32),   # per-row (x_sum + t_sum) accum
        ],
        compiler_params=pltpu.CompilerParams(
            dimension_semantics=("parallel", "arbitrary"),
            vmem_limit_bytes=vmem_limit,
        ),
    )(x, t)

    # Garbage dice values from the partial last row block are sliced off here.
    dice = dice_blocks.reshape(-1)[:nc]
    dice_mean = jnp.mean(dice)
    loss_mean = 1.0 - dice_mean             # loss.mean() == 1 - dice.mean()
    return loss_mean, dice_mean


def _dice_loss_ref(inputs, targets, smooth=1.0):
    intersection = (inputs * targets).sum(axis=2).sum(axis=2)
    dice = (2.0 * intersection + smooth) / (
        inputs.sum(axis=2).sum(axis=2) + targets.sum(axis=2).sum(axis=2) + smooth
    )
    loss = 1.0 - dice
    return loss.mean(), dice.mean()


if __name__ == "__main__":
    key = jax.random.PRNGKey(0)
    k1, k2 = jax.random.split(key)

    N, C, H, W = 2, 4, 16, 16
    inputs = jax.random.uniform(k1, (N, C, H, W), dtype=jnp.float32)
    targets = (jax.random.uniform(k2, (N, C, H, W)) > 0.5).astype(jnp.float32)

    loss_mean, dice_mean = dice_loss(inputs, targets, smooth=1.0)
    jax.block_until_ready((loss_mean, dice_mean))

    ref_loss, ref_dice = _dice_loss_ref(inputs, targets, smooth=1.0)
    assert jnp.allclose(loss_mean, ref_loss, atol=1e-5, rtol=1e-5)
    assert jnp.allclose(dice_mean, ref_dice, atol=1e-5, rtol=1e-5)

    print("KERNEL_OK")
</pallas_src>

<mosaic_0001>
module attributes {stable_mosaic.version = 11 : i64} {
  func.func @_dice_kernel(%arg0: i32, %arg1: i32, %arg2: memref<8x256xf32, #tpu.memory_space<vmem>>, %arg3: memref<8x256xf32, #tpu.memory_space<vmem>>, %arg4: memref<1x8xf32, #tpu.memory_space<vmem>>, %arg5: memref<1x8xf32, #tpu.memory_space<vmem>>, %arg6: memref<1x8xf32, #tpu.memory_space<vmem>>) attributes {dimension_semantics = [#tpu.dimension_semantics<parallel>, #tpu.dimension_semantics<arbitrary>], iteration_bounds = array<i64: 1, 1>, scalar_prefetch = 0 : i64, scratch_operands = 2 : i64, tpu.core_type = #tpu.core_type<tc>, window_params = [{transform_indices = @transform_0, window_bounds = array<i64: 8, 256>}, {transform_indices = @transform_1, window_bounds = array<i64: 8, 256>}, {transform_indices = @transform_2, window_bounds = array<i64: 1, 8>}]} {
    %c0_i32 = arith.constant 0 : i32
    %0 = arith.cmpi eq, %arg1, %c0_i32 : i32
    %1 = arith.extui %0 : i1 to i32
    %c0_i32_0 = arith.constant 0 : i32
    %2 = arith.cmpi ne, %1, %c0_i32_0 : i32
    scf.if %2 {
      %cst_15 = arith.constant 0.000000e+00 : f32
      %20 = vector.broadcast %cst_15 : f32 to vector<1x8xf32>
      %c0_16 = arith.constant 0 : index
      %c0_17 = arith.constant 0 : index
      %21 = vector.load %arg5[%c0_16, %c0_17] : memref<1x8xf32, #tpu.memory_space<vmem>>, vector<1x8xf32>
      tpu.vector_store %arg5[%c0_16, %c0_17], %20 {strides = array<i32>} : memref<1x8xf32, #tpu.memory_space<vmem>>, vector<1x8xf32>,
      %cst_18 = arith.constant 0.000000e+00 : f32
      %22 = vector.broadcast %cst_18 : f32 to vector<1x8xf32>
      %c0_19 = arith.constant 0 : index
      %c0_20 = arith.constant 0 : index
      %23 = vector.load %arg6[%c0_19, %c0_20] : memref<1x8xf32, #tpu.memory_space<vmem>>, vector<1x8xf32>
      tpu.vector_store %arg6[%c0_19, %c0_20], %22 {strides = array<i32>} : memref<1x8xf32, #tpu.memory_space<vmem>>, vector<1x8xf32>,
    } else {
    }
    %c0 = arith.constant 0 : index
    %c0_1 = arith.constant 0 : index
    %3 = vector.load %arg2[%c0, %c0_1] : memref<8x256xf32, #tpu.memory_space<vmem>>, vector<8x256xf32>
    %c0_2 = arith.constant 0 : index
    %c0_3 = arith.constant 0 : index
    %4 = vector.load %arg3[%c0_2, %c0_3] : memref<8x256xf32, #tpu.memory_space<vmem>>, vector<8x256xf32>
    %5 = arith.mulf %3, %4 : vector<8x256xf32>
    %cst = arith.constant dense<0.000000e+00> : vector<8xf32>
    %6 = vector.multi_reduction <add>, %5, %cst [1] : vector<8x256xf32> to vector<8xf32>
    %7 = arith.addf %3, %4 : vector<8x256xf32>
    %cst_4 = arith.constant dense<0.000000e+00> : vector<8xf32>
    %8 = vector.multi_reduction <add>, %7, %cst_4 [1] : vector<8x256xf32> to vector<8xf32>
    %c0_5 = arith.constant 0 : index
    %c0_6 = arith.constant 0 : index
    %9 = vector.load %arg5[%c0_5, %c0_6] : memref<1x8xf32, #tpu.memory_space<vmem>>, vector<1x8xf32>
    %10 = vector.shape_cast %6 : vector<8xf32> to vector<1x8xf32>
    %11 = arith.addf %9, %10 : vector<1x8xf32>
    %c0_7 = arith.constant 0 : index
    %c0_8 = arith.constant 0 : index
    %12 = vector.load %arg5[%c0_7, %c0_8] : memref<1x8xf32, #tpu.memory_space<vmem>>, vector<1x8xf32>
    tpu.vector_store %arg5[%c0_7, %c0_8], %11 {strides = array<i32>} : memref<1x8xf32, #tpu.memory_space<vmem>>, vector<1x8xf32>,
    %c0_9 = arith.constant 0 : index
    %c0_10 = arith.constant 0 : index
    %13 = vector.load %arg6[%c0_9, %c0_10] : memref<1x8xf32, #tpu.memory_space<vmem>>, vector<1x8xf32>
    %14 = vector.shape_cast %8 : vector<8xf32> to vector<1x8xf32>
    %15 = arith.addf %13, %14 : vector<1x8xf32>
    %c0_11 = arith.constant 0 : index
    %c0_12 = arith.constant 0 : index
    %16 = vector.load %arg6[%c0_11, %c0_12] : memref<1x8xf32, #tpu.memory_space<vmem>>, vector<1x8xf32>
    tpu.vector_store %arg6[%c0_11, %c0_12], %15 {strides = array<i32>} : memref<1x8xf32, #tpu.memory_space<vmem>>, vector<1x8xf32>,
    %c0_i32_13 = arith.constant 0 : i32
    %17 = arith.cmpi eq, %arg1, %c0_i32_13 : i32
    %18 = arith.extui %17 : i1 to i32
    %c0_i32_14 = arith.constant 0 : i32
    %19 = arith.cmpi ne, %18, %c0_i32_14 : i32
    scf.if %19 {
      %c0_15 = arith.constant 0 : index
      %c0_16 = arith.constant 0 : index
      %20 = vector.load %arg5[%c0_15, %c0_16] : memref<1x8xf32, #tpu.memory_space<vmem>>, vector<1x8xf32>
      %cst_17 = arith.constant 2.000000e+00 : f32
      %21 = vector.broadcast %cst_17 : f32 to vector<1x8xf32>
      %22 = arith.mulf %21, %20 : vector<1x8xf32>
      %cst_18 = arith.constant 1.000000e+00 : f32
      %23 = vector.broadcast %cst_18 : f32 to vector<1x8xf32>
      %24 = arith.addf %22, %23 : vector<1x8xf32>
      %c0_19 = arith.constant 0 : index
      %c0_20 = arith.constant 0 : index
      %25 = vector.load %arg6[%c0_19, %c0_20] : memref<1x8xf32, #tpu.memory_space<vmem>>, vector<1x8xf32>
      %cst_21 = arith.constant 1.000000e+00 : f32
      %26 = vector.broadcast %cst_21 : f32 to vector<1x8xf32>
      %27 = arith.addf %25, %26 : vector<1x8xf32>
      %28 = arith.divf %24, %27 : vector<1x8xf32>
      %c0_22 = arith.constant 0 : index
      %c0_23 = arith.constant 0 : index
      %29 = vector.load %arg4[%c0_22, %c0_23] : memref<1x8xf32, #tpu.memory_space<vmem>>, vector<1x8xf32>
      tpu.vector_store %arg4[%c0_22, %c0_23], %28 {strides = array<i32>} : memref<1x8xf32, #tpu.memory_space<vmem>>, vector<1x8xf32>,
    } else {
    }
    return
  }
  func.func @transform_0(%arg0: i32, %arg1: i32) -> (i32, i32) {
    %c0_i32 = arith.constant 0 : i32
    return %arg0, %arg1 : i32, i32
  }
  func.func @transform_1(%arg0: i32, %arg1: i32) -> (i32, i32) {
    %c0_i32 = arith.constant 0 : i32
    return %arg0, %arg1 : i32, i32
  }
  func.func @transform_2(%arg0: i32, %arg1: i32) -> (i32, i32) {
    %c0_i32 = arith.constant 0 : i32
    %c0_i32_0 = arith.constant 0 : i32
    return %arg0, %c0_i32 : i32, i32
  }
}

</mosaic_0001>

<llo_original>
// kernel: tpu_custom_call.1
$region0: #{tpu_custom_call.1}
  #allocation0 [shape = 'u32[]', space=smem, size = 0x4, offset = 0x4, fixed_abs, tag = 'smem constant byte address 0x4 - core index']
  #allocation1 [shape = 'u32[144,128]{1,0:T(1,128)}', space=vmem, size = 0x12000, scoped, tag = 'internal scratch']
  #allocation2 [shape = 'f32[1,8]{1,0:T(1,128)}', space=vmem, size = 0x200, scoped, tag = 'scratch operand']
  #allocation3 [shape = 'f32[1,8]{1,0:T(1,128)}', space=vmem, size = 0x200, scoped, tag = 'scratch operand']
  %s0 = inlined_call_operand.hbm [shape: f32[8,256], index: 0, kind: input, shape index: {}]
  %s1 = inlined_call_operand.hbm [shape: f32[8,256], index: 1, kind: input, shape index: {}]
  %s2 = inlined_call_operand.hbm [shape: f32[1,8], index: 2, kind: output, shape index: {}]
  %s3 = sld [smem:[#allocation0]]
  $region34: #{tpu_custom_call.1} parent=0
    _
  %s5 = ssub.s32 1, %s3
  %s6 = scalar_select 0, %s5, %s3
  $region1: #{tpu_custom_call.1} parent=0
    #allocation4 [shape = 'u8[8192]{0}', space=vmem, size = 0x2000, scoped, tag = 'input window, operand 0, single buffered']
    #allocation5 [shape = 's32[1]{0}', space=sflag, size = 0x4, scoped, tag = 'scoped memory for tpu_custom_call.1']
    #allocation6 [shape = 's32[1]{0}', space=sflag, size = 0x4, scoped, tag = 'scoped memory for tpu_custom_call.1']
    #allocation7 [shape = 'u8[8192]{0}', space=vmem, size = 0x2000, scoped, tag = 'input window, operand 1, single buffered']
    #allocation8 [shape = 's32[1]{0}', space=sflag, size = 0x4, scoped, tag = 'scoped memory for tpu_custom_call.1']
    #allocation9 [shape = 'u8[512]{0}', space=vmem, size = 0x400, scoped, tag = 'output window, operand 0, single buffered']
    %7 = vsyncpa [#allocation5], 0
    %8 = vsyncpa [#allocation8], 0
    %9 = vsyncpa [#allocation6], 0
    // Predicated region
    $region2: #{tpu_custom_call.1} parent=1 // pred_check
      _
    $region3: #{tpu_custom_call.1} parent=1 // pred_check_branch
      %11 = sbr.rel (0) target = $region5
    $region4: #{tpu_custom_call.1} parent=1 // pred_region
      %s13 = ssub.s32 256, 256
      %14 = vsyncadd [#allocation5], %s13
      %s16 = sshll.u32 [#allocation4], 4
      %s17 = int_to_ptr.vmem [resolvable:$true] %s16
      %19 = dma.hbm_to_vmem [thread:$0]  %s0, 256, %s17, [#allocation5]
    $region5: #{tpu_custom_call.1} parent=1 // pred_fallthru
      _
    // Predicated region
    $region6: #{tpu_custom_call.1} parent=1 // pred_check
      _
    $region7: #{tpu_custom_call.1} parent=1 // pred_check_branch
      %21 = sbr.rel (0) target = $region9
    $region8: #{tpu_custom_call.1} parent=1 // pred_region
      %s23 = ssub.s32 256, 256
      %24 = vsyncadd [#allocation8], %s23
      %s26 = sshll.u32 [#allocation7], 4
      %s27 = int_to_ptr.vmem [resolvable:$true] %s26
      %29 = dma.hbm_to_vmem [thread:$0]  %s1, 256, %s27, [#allocation8]
    $region9: #{tpu_custom_call.1} parent=1 // pred_fallthru
      _
    // Predicated region
    $region10: #{tpu_custom_call.1} parent=1 // pred_check
      _
    $region11: #{tpu_custom_call.1} parent=1 // pred_check_branch
      %31 = sbr.rel (0) target = $region13
    $region12: #{tpu_custom_call.1} parent=1 // pred_region
      %32 = dma.done [#allocation5], 256
    $region13: #{tpu_custom_call.1} parent=1 // pred_fallthru
      _
    // Predicated region
    $region14: #{tpu_custom_call.1} parent=1 // pred_check
      _
    $region15: #{tpu_custom_call.1} parent=1 // pred_check_branch
      %34 = sbr.rel (0) target = $region17
    $region16: #{tpu_custom_call.1} parent=1 // pred_region
      %35 = dma.done [#allocation8], 256
    $region17: #{tpu_custom_call.1} parent=1 // pred_fallthru
      _
    %p36 = scmp.eq.s32.totalorder 0, 0
    // Predicated region
    $region18: #{tpu_custom_call.1} parent=1 // pred_check
      %p37 = pneg %p36
    $region19: #{tpu_custom_call.1} parent=1 // pred_check_branch
      %39 = sbr.rel (%p37) target = $region21
    $region20: #{tpu_custom_call.1} parent=1 // pred_region
      %vm40 = vcmask 57344
      %41 = vst.msk [vmem:[#allocation2] sm:$0x1] %vm40, 0.0
      %42 = vst.msk [vmem:[#allocation3] sm:$0x1] %vm40, 0.0
    $region21: #{tpu_custom_call.1} parent=1 // pred_fallthru
      _
    %v43 = vld [vmem:[#allocation4] sm:$0xff]
    %v44 = vld [vmem:[#allocation4 + $0x8] sm:$0xff]
    %v45 = vld [vmem:[#allocation7] sm:$0xff]
    %v46 = vld [vmem:[#allocation7 + $0x8] sm:$0xff]
    %v47 = vmul.f32 %v43, %v45
    %v48 = vmul.f32 %v44, %v46
    %v49 = vadd.f32 %v47, %v48
    %50 = vadd.xlane.f32.xlu0 %v49
    %v51 = vpop.xlane.xlu0 %50
    %v52 = vadd.f32 %v43, %v45
    %v53 = vadd.f32 %v44, %v46
    %v54 = vadd.f32 %v52, %v53
    %55 = vadd.xlane.f32.xlu0 %v54
    %v56 = vpop.xlane.xlu0 %55
    %v57 = vld [vmem:[#allocation2] sm:$0x1]
    %v59 = vlaneseq
    %v60 = vshrl.u32 %v59, 7
    %v61 = vsub.s32 0, %v60
    %v62 = vrot.slane %v51, %v61
    %v63 = vlaneseq
    %v64 = vshrl.u32 %v63, 7
    %v65 = vsub.s32 1, %v64
    %v66 = vrot.slane %v51, %v65
    %v67 = vlaneseq
    %v68 = vshrl.u32 %v67, 7
    %v69 = vsub.s32 2, %v68
    %v70 = vrot.slane %v51, %v69
    %v71 = vlaneseq
    %v72 = vshrl.u32 %v71, 7
    %v73 = vsub.s32 3, %v72
    %v74 = vrot.slane %v51, %v73
    %v75 = vlaneseq
    %v76 = vshrl.u32 %v75, 7
    %v77 = vsub.s32 4, %v76
    %v78 = vrot.slane %v51, %v77
    %v79 = vlaneseq
    %v80 = vshrl.u32 %v79, 7
    %v81 = vsub.s32 5, %v80
    %v82 = vrot.slane %v51, %v81
    %v83 = vlaneseq
    %v84 = vshrl.u32 %v83, 7
    %v85 = vsub.s32 6, %v84
    %v86 = vrot.slane %v51, %v85
    %v87 = vlaneseq
    %v88 = vshrl.u32 %v87, 7
    %v89 = vsub.s32 7, %v88
    %v90 = vrot.slane %v51, %v89
    %v91 = vcombine.low %v62, %v66
    %v92 = vcombine.low %v70, %v74
    %v93 = vcombine.low %v78, %v82
    %v94 = vcombine.low %v86, %v90
    %v96 = vunpack.c.l.s4 1966171168
    %v97 = vunpack.c.0.s8 %v96
    %v98 = vlaneseq
    %v99 = vshrl.u32 %v98, 7
    %v100 = vsub.s32 %v97, %v99
    %v101 = vrot.slane %v91, %v100
    %v103 = vunpack.c.l.s4 1966171168
    %v104 = vunpack.c.0.s8 %v103
    %v105 = vlaneseq
    %v106 = vshrl.u32 %v105, 7
    %v107 = vsub.s32 %v104, %v106
    %v108 = vrot.slane %v92, %v107
    %v110 = vunpack.c.l.s4 1966171168
    %v111 = vunpack.c.0.s8 %v110
    %v112 = vlaneseq
    %v113 = vshrl.u32 %v112, 7
    %v114 = vsub.s32 %v111, %v113
    %v115 = vrot.slane %v93, %v114
    %v117 = vunpack.c.l.s4 1966171168
    %v118 = vunpack.c.0.s8 %v117
    %v119 = vlaneseq
    %v120 = vshrl.u32 %v119, 7
    %v121 = vsub.s32 %v118, %v120
    %v122 = vrot.slane %v94, %v121
    %v123 = vcombine.low %v101, %v108
    %v124 = vcombine.low %v115, %v122
    %v126 = vunpack.c.l.s4 1966171168
    %v127 = vunpack.c.0.s8 %v126
    %v128 = vlaneseq
    %v129 = vshrl.u32 %v128, 7
    %v130 = vsub.s32 %v127, %v129
    %v131 = vrot.slane %v123, %v130
    %v133 = vunpack.c.l.s4 1966171168
    %v134 = vunpack.c.0.s8 %v133
    %v135 = vlaneseq
    %v136 = vshrl.u32 %v135, 7
    %v137 = vsub.s32 %v134, %v136
    %v138 = vrot.slane %v124, %v137
    %v139 = vcombine.low %v131, %v138
    %140 = vset.pattern.permute.xlu0 0
    %141 = vperm.xlu0 %140, %v139
    %v142 = vpop.permute.xlu0 %141
    %v143 = vlaneseq
    %v144 = vand.u32 %v143, 127
    %v145 = vlaneseq
    %v146 = vshrl.u32 %v145, 7
    %v147 = vsub.s32 %v144, %v146
    %v148 = vrot.slane %v142, %v147
    %v150 = vunpack.c.l.s4 1966171168
    %v151 = vunpack.c.0.s8 %v150
    %v152 = vlaneseq
    %v153 = vshrl.u32 %v152, 7
    %v154 = vsub.s32 %v151, %v153
    %v155 = vrot.slane %v148, %v154
    %v157 = vunpack.c.l.s4 1966171168
    %v158 = vunpack.c.0.s8 %v157
    %v159 = vlaneseq
    %v160 = vshrl.u32 %v159, 7
    %v161 = vsub.s32 %v158, %v160
    %v162 = vrot.slane %v155, %v161
    %v164 = vadd.f32 %v57, %v162
    %vm165 = vcmask 57344
    %166 = vst.msk [vmem:[#allocation2] sm:$0x1] %vm165, %v164
    %v167 = vld [vmem:[#allocation3] sm:$0x1]
    %v169 = vlaneseq
    %v170 = vshrl.u32 %v169, 7
    %v171 = vsub.s32 0, %v170
    %v172 = vrot.slane %v56, %v171
    %v173 = vlaneseq
    %v174 = vshrl.u32 %v173, 7
    %v175 = vsub.s32 1, %v174
    %v176 = vrot.slane %v56, %v175
    %v177 = vlaneseq
    %v178 = vshrl.u32 %v177, 7
    %v179 = vsub.s32 2, %v178
    %v180 = vrot.slane %v56, %v179
    %v181 = vlaneseq
    %v182 = vshrl.u32 %v181, 7
    %v183 = vsub.s32 3, %v182
    %v184 = vrot.slane %v56, %v183
    %v185 = vlaneseq
    %v186 = vshrl.u32 %v185, 7
    %v187 = vsub.s32 4, %v186
    %v188 = vrot.slane %v56, %v187
    %v189 = vlaneseq
    %v190 = vshrl.u32 %v189, 7
    %v191 = vsub.s32 5, %v190
    %v192 = vrot.slane %v56, %v191
    %v193 = vlaneseq
    %v194 = vshrl.u32 %v193, 7
    %v195 = vsub.s32 6, %v194
    %v196 = vrot.slane %v56, %v195
    %v197 = vlaneseq
    %v198 = vshrl.u32 %v197, 7
    %v199 = vsub.s32 7, %v198
    %v200 = vrot.slane %v56, %v199
    %v201 = vcombine.low %v172, %v176
    %v202 = vcombine.low %v180, %v184
    %v203 = vcombine.low %v188, %v192
    %v204 = vcombine.low %v196, %v200
    %v206 = vunpack.c.l.s4 1966171168
    %v207 = vunpack.c.0.s8 %v206
    %v208 = vlaneseq
    %v209 = vshrl.u32 %v208, 7
    %v210 = vsub.s32 %v207, %v209
    %v211 = vrot.slane %v201, %v210
    %v213 = vunpack.c.l.s4 1966171168
    %v214 = vunpack.c.0.s8 %v213
    %v215 = vlaneseq
    %v216 = vshrl.u32 %v215, 7
    %v217 = vsub.s32 %v214, %v216
    %v218 = vrot.slane %v202, %v217
    %v220 = vunpack.c.l.s4 1966171168
    %v221 = vunpack.c.0.s8 %v220
    %v222 = vlaneseq
    %v223 = vshrl.u32 %v222, 7
    %v224 = vsub.s32 %v221, %v223
    %v225 = vrot.slane %v203, %v224
    %v227 = vunpack.c.l.s4 1966171168
    %v228 = vunpack.c.0.s8 %v227
    %v229 = vlaneseq
    %v230 = vshrl.u32 %v229, 7
    %v231 = vsub.s32 %v228, %v230
    %v232 = vrot.slane %v204, %v231
    %v233 = vcombine.low %v211, %v218
    %v234 = vcombine.low %v225, %v232
    %v236 = vunpack.c.l.s4 1966171168
    %v237 = vunpack.c.0.s8 %v236
    %v238 = vlaneseq
    %v239 = vshrl.u32 %v238, 7
    %v240 = vsub.s32 %v237, %v239
    %v241 = vrot.slane %v233, %v240
    %v243 = vunpack.c.l.s4 1966171168
    %v244 = vunpack.c.0.s8 %v243
    %v245 = vlaneseq
    %v246 = vshrl.u32 %v245, 7
    %v247 = vsub.s32 %v244, %v246
    %v248 = vrot.slane %v234, %v247
    %v249 = vcombine.low %v241, %v248
    %250 = vset.pattern.permute.xlu0 0
    %251 = vperm.xlu0 %250, %v249
    %v252 = vpop.permute.xlu0 %251
    %v253 = vlaneseq
    %v254 = vshrl.u32 %v253, 7
    %v255 = vsub.s32 %v144, %v254
    %v256 = vrot.slane %v252, %v255
    %v258 = vunpack.c.l.s4 1966171168
    %v259 = vunpack.c.0.s8 %v258
    %v260 = vlaneseq
    %v261 = vshrl.u32 %v260, 7
    %v262 = vsub.s32 %v259, %v261
    %v263 = vrot.slane %v256, %v262
    %v265 = vunpack.c.l.s4 1966171168
    %v266 = vunpack.c.0.s8 %v265
    %v267 = vlaneseq
    %v268 = vshrl.u32 %v267, 7
    %v269 = vsub.s32 %v266, %v268
    %v270 = vrot.slane %v263, %v269
    %v272 = vadd.f32 %v167, %v270
    %273 = vst.msk [vmem:[#allocation3] sm:$0x1] %vm165, %v272
    // Predicated region
    $region22: #{tpu_custom_call.1} parent=1 // pred_check
      %p274 = pneg %p36
    $region23: #{tpu_custom_call.1} parent=1 // pred_check_branch
      %276 = sbr.rel (%p274) target = $region25
    $region24: #{tpu_custom_call.1} parent=1 // pred_region
      %v277 = vld [vmem:[#allocation2] sm:$0x1]
      %v278 = vmul.f32 %v277, 2.0
      %v279 = vadd.f32 %v278, 1.0
      %v280 = vld [vmem:[#allocation3] sm:$0x1]
      %v281 = vadd.f32 %v280, 1.0
      %v282 = vrcp.pop %v281
      %v283 = vmul.f32 %v279, %v282
      %284 = vst.msk [vmem:[#allocation9] sm:$0x1] %vm165, %v283
    $region25: #{tpu_custom_call.1} parent=1 // pred_fallthru
      _
    // Predicated region
    $region26: #{tpu_custom_call.1} parent=1 // pred_check
      _
    $region27: #{tpu_custom_call.1} parent=1 // pred_check_branch
      %286 = sbr.rel (0) target = $region29
    $region28: #{tpu_custom_call.1} parent=1 // pred_region
      %s288 = ssub.s32 16, 16
      %289 = vsyncadd [#allocation6], %s288
      %s291 = sshll.u32 [#allocation9], 4
      %s292 = int_to_ptr.vmem [resolvable:$true] %s291
      %294 = dma.vmem_to_hbm [thread:$0]  %s292, 16, %s2, [#allocation6]
    $region29: #{tpu_custom_call.1} parent=1 // pred_fallthru
      _
    // Predicated region
    $region30: #{tpu_custom_call.1} parent=1 // pred_check
      _
    $region31: #{tpu_custom_call.1} parent=1 // pred_check_branch
      %296 = sbr.rel (0) target = $region33
    $region32: #{tpu_custom_call.1} parent=1 // pred_region
      %297 = dma.done [#allocation6], 16
    $region33: #{tpu_custom_call.1} parent=1 // pred_fallthru
      _
    %298 = vsyncpa [#allocation5], 1
    %299 = vsyncpa [#allocation8], 1
    %300 = vsyncpa [#allocation6], 1

</llo_original>
